<compile_context>
chip_gen: v7x
topology: tpu7x:2x2x1
jax: 0.10.0
libtpu: 0.0.40
codegen_flags: <defaults>
</compile_context>

<pallas_src>
import functools
import math

import jax
import jax.numpy as jnp
from jax import lax
from jax.experimental import pallas as pl
from jax.experimental.pallas import tpu as pltpu


_LANES = 128


def _tpu_config():
    """Per-generation knobs: (#TensorCores to split over, logits block bytes, vmem limit)."""
    kind = ""
    try:
        kind = jax.devices()[0].device_kind.lower()
    except Exception:
        pass
    if "v7" in kind:                   # 2 TCs/chip, 64 MiB VMEM per TC: keep blocks modest
        return 2, 4 << 20, 48 << 20
    if "v6" in kind:                   # 1 TC, 128 MiB physical VMEM: big blocks
        return 1, 6 << 20, 96 << 20
    if "v5p" in kind or "v4" in kind:  # megacore chips: 2 TCs
        return 2, 4 << 20, 64 << 20
    if "v5" in kind:                   # v5e / v5 lite: 1 TC, HBM-bound
        return 1, 4 << 20, 64 << 20
    return 1, 2 << 20, None            # unknown: conservative defaults


def _loss_stats_kernel(logits_ref, tgt_ref, tp_ref, sp_ref, cnt_ref, nll_ref,
                       *, hw_valid, mask_tail):
    # logits_ref: (B, C, R, 128) network dtype; tgt_ref: (B, R, 128) int8/int32
    # outputs: (1, B, C, 128) f32 lane-shaped accumulators, resident across grid axis 1
    s = pl.program_id(1)

    @pl.when(s == 0)
    def _():
        tp_ref[...] = jnp.zeros_like(tp_ref)
        sp_ref[...] = jnp.zeros_like(sp_ref)
        cnt_ref[...] = jnp.zeros_like(cnt_ref)
        nll_ref[...] = jnp.zeros_like(nll_ref)

    x = logits_ref[...].astype(jnp.float32)              # (B, C, R, 128)
    t = tgt_ref[...].astype(jnp.int32)                   # (B, R, 128)
    B, C, R, L = x.shape

    # numerically-stable softmax over the class axis.  C is a leading (untiled)
    # dim, so these max/sum are cross-vreg elementwise VPU ops, not XLU reductions.
    m = jnp.max(x, axis=1, keepdims=True)                 # (B, 1, R, 128)
    xs = x - m
    e = jnp.exp(xs)
    denom = jnp.sum(e, axis=1, keepdims=True)             # (B, 1, R, 128)
    inv = pl.reciprocal(denom, approx=False)              # one reciprocal per pixel
    p = e * inv
    log_denom = jnp.log(denom)[:, 0]                      # (B, R, 128), for NLL

    if mask_tail:
        # Global pixel index of every element of this tile; anything >= hw_valid
        # (partial edge block padding, duplicated clamped blocks, flat-pad tail)
        # is excluded.  jnp.where is a select, so garbage/NaN rows cannot leak.
        blk = pl.program_id(0) * pl.num_programs(1) + s
        row = lax.broadcasted_iota(jnp.int32, (R, L), 0)
        lane = lax.broadcasted_iota(jnp.int32, (R, L), 1)
        pix = blk * (R * L) + row * L + lane
        valid = pix < hw_valid                             # (R, 128) bool
    else:
        valid = None

    # Per-class masked accumulation (no materialized one-hot).  Reduce only over
    # the sublane (R) axis here; the final 128-wide lane reduce happens in glue.
    tp_parts, sp_parts, cnt_parts, nll_parts = [], [], [], []
    for c in range(C):
        p_c = p[:, c]                                      # (B, R, 128)
        nll_c = log_denom - xs[:, c]                       # -log_softmax at class c
        sel = t == c
        if valid is not None:
            sel = jnp.logical_and(sel, valid)
            p_masked = jnp.where(valid, p_c, 0.0)
        else:
            p_masked = p_c
        tp_parts.append(jnp.sum(jnp.where(sel, p_c, 0.0), axis=1))      # (B, 128)
        sp_parts.append(jnp.sum(p_masked, axis=1))
        cnt_parts.append(jnp.sum(sel.astype(jnp.float32), axis=1))
        nll_parts.append(jnp.sum(jnp.where(sel, nll_c, 0.0), axis=1))

    tp_ref[0] = tp_ref[0] + jnp.stack(tp_parts, axis=1)    # (B, C, 128)
    sp_ref[0] = sp_ref[0] + jnp.stack(sp_parts, axis=1)
    cnt_ref[0] = cnt_ref[0] + jnp.stack(cnt_parts, axis=1)
    nll_ref[0] = nll_ref[0] + jnp.stack(nll_parts, axis=1)


@functools.partial(jax.jit, static_argnames=("weight_ce", "weight_dice", "smooth"))
def dc_and_ce_loss(net_output, target, weight_ce=1.0, weight_dice=1.0, smooth=1.0):
    # net_output: [B, C, *spatial] logits; target: [B, 1, *spatial] class indices.
    B, C = net_output.shape[:2]
    HW = math.prod(net_output.shape[2:])

    ncores, block_bytes, vmem_limit = _tpu_config()

    logits = net_output.reshape(B, C, HW)                  # keep network dtype; cast in-kernel
    tgt_dtype = jnp.int8 if C <= 127 else jnp.int32        # shrink the target HBM stream
    tgt = target.reshape(B, HW).astype(tgt_dtype)

    # the flat spatial axis must be a multiple of 128 for the lane-dense
    # (rows, 128) layout; pad only in that (rare for nnU-Net patch sizes) case.
    HWp = -(-HW // _LANES) * _LANES
    if HWp != HW:
        # TODO(synk): full copy of the logits, only hit when HW % 128 != 0; the
        # pad contents are irrelevant (masked in-kernel by pixel index).
        logits = jnp.pad(logits, ((0, 0), (0, 0), (0, HWp - HW)))
        tgt = jnp.pad(tgt, ((0, 0), (0, HWp - HW)))
    rows = HWp // _LANES
    logits = logits.reshape(B, C, rows, _LANES)
    tgt = tgt.reshape(B, rows, _LANES)

    # pick r_tile so the logits block is ~block_bytes; 32-row granularity covers
    # f32(8)/bf16(16)/int8(32) sublane packing.  If everything fits, one block.
    per_row = B * C * _LANES * logits.dtype.itemsize
    r_budget = max(32, (block_bytes // per_row) // 32 * 32)
    r_tile = rows if rows <= r_budget else r_budget

    n_blocks = -(-rows // r_tile)
    steps = -(-n_blocks // ncores)
    covered = ncores * steps * r_tile * _LANES
    mask_tail = covered != HW           # any padded/duplicated tail -> mask in kernel

    def logits_map(p, s):
        blk = jnp.minimum(p * steps + s, n_blocks - 1)   # clamp: never a fully-OOB block
        return (0, 0, blk, 0)

    def tgt_map(p, s):
        blk = jnp.minimum(p * steps + s, n_blocks - 1)
        return (0, blk, 0)

    kernel = functools.partial(_loss_stats_kernel, hw_valid=HW, mask_tail=mask_tail)

    out_shapes = tuple(jax.ShapeDtypeStruct((ncores, B, C, _LANES), jnp.float32)
                       for _ in range(4))
    out_specs = tuple(pl.BlockSpec((1, B, C, _LANES), lambda p, s: (p, 0, 0, 0))
                      for _ in range(4))

    tp, sum_p, cnt, nll = pl.pallas_call(
        kernel,
        out_shape=out_shapes,
        grid_spec=pltpu.PrefetchScalarGridSpec(
            num_scalar_prefetch=0,
            grid=(ncores, steps),
            in_specs=[
                pl.BlockSpec((B, C, r_tile, _LANES), logits_map),
                pl.BlockSpec((B, r_tile, _LANES), tgt_map),
            ],
            out_specs=out_specs,
        ),
        compiler_params=pltpu.CompilerParams(
            dimension_semantics=("parallel", "arbitrary"),
            vmem_limit_bytes=vmem_limit,
        ),
    )(logits, tgt)

    # ---- tiny glue: final lane/core reduce + dice formula + CE combine ----
    tp = jnp.sum(tp, axis=(0, 3))          # (B, C)
    sum_p = jnp.sum(sum_p, axis=(0, 3))
    cnt = jnp.sum(cnt, axis=(0, 3))
    nll = jnp.sum(nll)

    fp = sum_p - tp
    fn = cnt - tp

    # SoftDiceLoss (apply_nonlin=softmax, batch_dice=False, do_bg=True, smooth)
    nominator = 2.0 * tp
    denominator = 2.0 * tp + fp + fn
    dc = (nominator + smooth) / jnp.maximum(denominator + smooth, 1e-8)
    dc_loss = -jnp.mean(dc)

    # RobustCrossEntropyLoss == nn.CrossEntropyLoss(reduction='mean')
    ce_loss = nll / jnp.float32(B * HW)

    return weight_ce * ce_loss + weight_dice * dc_loss


def _reference(net_output, target, weight_ce=1.0, weight_dice=1.0, smooth=1.0):
    # pure-JAX reference of the same forward pass, for a sanity check
    B, C = net_output.shape[:2]
    HW = math.prod(net_output.shape[2:])
    x = net_output.reshape(B, C, HW).astype(jnp.float32)
    t = target.reshape(B, HW).astype(jnp.int32)
    logp = jax.nn.log_softmax(x, axis=1)
    p = jnp.exp(logp)
    onehot = jax.nn.one_hot(t, C, axis=1, dtype=jnp.float32)          # (B, C, HW)
    tp = jnp.sum(p * onehot, axis=2)
    fp = jnp.sum(p * (1.0 - onehot), axis=2)
    fn = jnp.sum((1.0 - p) * onehot, axis=2)
    dc = (2.0 * tp + smooth) / jnp.maximum(2.0 * tp + fp + fn + smooth, 1e-8)
    dc_loss = -jnp.mean(dc)
    ce_loss = -jnp.mean(jnp.sum(onehot * logp, axis=1))
    return weight_ce * ce_loss + weight_dice * dc_loss


if __name__ == "__main__":
    key = jax.random.PRNGKey(0)
    k1, k2, k3, k4 = jax.random.split(key, 4)

    # case 1: 128-aligned spatial size (no padding, no tail masking)
    B, C, H, W = 2, 4, 32, 32
    net_output = jax.random.normal(k1, (B, C, H, W), dtype=jnp.float32)
    target = jax.random.randint(k2, (B, 1, H, W), 0, C, dtype=jnp.int32)
    loss = jax.block_until_ready(dc_and_ce_loss(net_output, target))
    ref = _reference(net_output, target)
    assert jnp.allclose(loss, ref, atol=5e-5, rtol=5e-5), (loss, ref)

    # case 2: non-128-aligned spatial size (exercises the in-kernel tail mask)
    B2, C2, H2, W2 = 2, 3, 24, 24
    net_output2 = jax.random.normal(k3, (B2, C2, H2, W2), dtype=jnp.float32)
    target2 = jax.random.randint(k4, (B2, 1, H2, W2), 0, C2, dtype=jnp.int32)
    loss2 = jax.block_until_ready(dc_and_ce_loss(net_output2, target2))
    ref2 = _reference(net_output2, target2)
    assert jnp.allclose(loss2, ref2, atol=5e-5, rtol=5e-5), (loss2, ref2)

    print("KERNEL_OK")
</pallas_src>

<mosaic_0001>
module attributes {stable_mosaic.version = 11 : i64} {
  func.func @_loss_stats_kernel(%arg0: i32, %arg1: i32, %arg2: memref<2x4x8x128xf32, #tpu.memory_space<vmem>>, %arg3: memref<2x8x128xi8, #tpu.memory_space<vmem>>, %arg4: memref<1x2x4x128xf32, #tpu.memory_space<vmem>>, %arg5: memref<1x2x4x128xf32, #tpu.memory_space<vmem>>, %arg6: memref<1x2x4x128xf32, #tpu.memory_space<vmem>>, %arg7: memref<1x2x4x128xf32, #tpu.memory_space<vmem>>) attributes {dimension_semantics = [#tpu.dimension_semantics<parallel>, #tpu.dimension_semantics<arbitrary>], iteration_bounds = array<i64: 1, 1>, scalar_prefetch = 0 : i64, scratch_operands = 0 : i64, tpu.core_type = #tpu.core_type<tc>, window_params = [{transform_indices = @transform_0, window_bounds = array<i64: 2, 4, 8, 128>}, {transform_indices = @transform_1, window_bounds = array<i64: 2, 8, 128>}, {transform_indices = @transform_2, window_bounds = array<i64: 1, 2, 4, 128>}, {transform_indices = @transform_3, window_bounds = array<i64: 1, 2, 4, 128>}, {transform_indices = @transform_4, window_bounds = array<i64: 1, 2, 4, 128>}, {transform_indices = @transform_5, window_bounds = array<i64: 1, 2, 4, 128>}]} {
    %c0_i32 = arith.constant 0 : i32
    %0 = arith.cmpi eq, %arg1, %c0_i32 : i32
    %1 = arith.extui %0 : i1 to i32
    %c0_i32_0 = arith.constant 0 : i32
    %2 = arith.cmpi ne, %1, %c0_i32_0 : i32
    scf.if %2 {
      %cst_65 = arith.constant 0.000000e+00 : f32
      %130 = vector.broadcast %cst_65 : f32 to vector<1x2x4x128xf32>
      %c0_66 = arith.constant 0 : index
      %c0_67 = arith.constant 0 : index
      %c0_68 = arith.constant 0 : index
      %c0_69 = arith.constant 0 : index
      %131 = vector.load %arg4[%c0_66, %c0_67, %c0_68, %c0_69] : memref<1x2x4x128xf32, #tpu.memory_space<vmem>>, vector<1x2x4x128xf32>
      tpu.vector_store %arg4[%c0_66, %c0_67, %c0_68, %c0_69], %130 {strides = array<i32>} : memref<1x2x4x128xf32, #tpu.memory_space<vmem>>, vector<1x2x4x128xf32>,
      %cst_70 = arith.constant 0.000000e+00 : f32
      %132 = vector.broadcast %cst_70 : f32 to vector<1x2x4x128xf32>
      %c0_71 = arith.constant 0 : index
      %c0_72 = arith.constant 0 : index
      %c0_73 = arith.constant 0 : index
      %c0_74 = arith.constant 0 : index
      %133 = vector.load %arg5[%c0_71, %c0_72, %c0_73, %c0_74] : memref<1x2x4x128xf32, #tpu.memory_space<vmem>>, vector<1x2x4x128xf32>
      tpu.vector_store %arg5[%c0_71, %c0_72, %c0_73, %c0_74], %132 {strides = array<i32>} : memref<1x2x4x128xf32, #tpu.memory_space<vmem>>, vector<1x2x4x128xf32>,
      %cst_75 = arith.constant 0.000000e+00 : f32
      %134 = vector.broadcast %cst_75 : f32 to vector<1x2x4x128xf32>
      %c0_76 = arith.constant 0 : index
      %c0_77 = arith.constant 0 : index
      %c0_78 = arith.constant 0 : index
      %c0_79 = arith.constant 0 : index
      %135 = vector.load %arg6[%c0_76, %c0_77, %c0_78, %c0_79] : memref<1x2x4x128xf32, #tpu.memory_space<vmem>>, vector<1x2x4x128xf32>
      tpu.vector_store %arg6[%c0_76, %c0_77, %c0_78, %c0_79], %134 {strides = array<i32>} : memref<1x2x4x128xf32, #tpu.memory_space<vmem>>, vector<1x2x4x128xf32>,
      %cst_80 = arith.constant 0.000000e+00 : f32
      %136 = vector.broadcast %cst_80 : f32 to vector<1x2x4x128xf32>
      %c0_81 = arith.constant 0 : index
      %c0_82 = arith.constant 0 : index
      %c0_83 = arith.constant 0 : index
      %c0_84 = arith.constant 0 : index
      %137 = vector.load %arg7[%c0_81, %c0_82, %c0_83, %c0_84] : memref<1x2x4x128xf32, #tpu.memory_space<vmem>>, vector<1x2x4x128xf32>
      tpu.vector_store %arg7[%c0_81, %c0_82, %c0_83, %c0_84], %136 {strides = array<i32>} : memref<1x2x4x128xf32, #tpu.memory_space<vmem>>, vector<1x2x4x128xf32>,
    } else {
    }
    %c0 = arith.constant 0 : index
    %c0_1 = arith.constant 0 : index
    %c0_2 = arith.constant 0 : index
    %c0_3 = arith.constant 0 : index
    %3 = vector.load %arg2[%c0, %c0_1, %c0_2, %c0_3] : memref<2x4x8x128xf32, #tpu.memory_space<vmem>>, vector<2x4x8x128xf32>
    %c0_4 = arith.constant 0 : index
    %c0_5 = arith.constant 0 : index
    %c0_6 = arith.constant 0 : index
    %4 = vector.load %arg3[%c0_4, %c0_5, %c0_6] : memref<2x8x128xi8, #tpu.memory_space<vmem>>, vector<2x8x128xi8>
    %5 = arith.extsi %4 : vector<2x8x128xi8> to vector<2x8x128xi32>
    %cst = arith.constant dense<0xFF800000> : vector<2x8x128xf32>
    %6 = vector.multi_reduction <maximumf>, %3, %cst [1] : vector<2x4x8x128xf32> to vector<2x8x128xf32>
    %7 = vector.shape_cast %6 : vector<2x8x128xf32> to vector<2x1x8x128xf32>
    %8 = vector.broadcast %7 : vector<2x1x8x128xf32> to vector<2x4x8x128xf32>
    %9 = arith.subf %3, %8 : vector<2x4x8x128xf32>
    %10 = math.exp %9 : vector<2x4x8x128xf32>
    %cst_7 = arith.constant dense<0.000000e+00> : vector<2x8x128xf32>
    %11 = vector.multi_reduction <add>, %10, %cst_7 [1] : vector<2x4x8x128xf32> to vector<2x8x128xf32>
    %12 = vector.shape_cast %11 : vector<2x8x128xf32> to vector<2x1x8x128xf32>
    %13 = tpu.reciprocal %12 : vector<2x1x8x128xf32> -> vector<2x1x8x128xf32>
    %14 = vector.broadcast %13 : vector<2x1x8x128xf32> to vector<2x4x8x128xf32>
    %15 = arith.mulf %10, %14 : vector<2x4x8x128xf32>
    %16 = math.log %12 : vector<2x1x8x128xf32>
    %17 = vector.shape_cast %16 : vector<2x1x8x128xf32> to vector<2x8x128xf32>
    %18 = vector.extract_strided_slice %15 {offsets = [0, 0, 0, 0], sizes = [2, 1, 8, 128], strides = [1, 1, 1, 1]} : vector<2x4x8x128xf32> to vector<2x1x8x128xf32>
    %19 = vector.shape_cast %18 : vector<2x1x8x128xf32> to vector<2x8x128xf32>
    %20 = vector.extract_strided_slice %9 {offsets = [0, 0, 0, 0], sizes = [2, 1, 8, 128], strides = [1, 1, 1, 1]} : vector<2x4x8x128xf32> to vector<2x1x8x128xf32>
    %21 = vector.shape_cast %20 : vector<2x1x8x128xf32> to vector<2x8x128xf32>
    %22 = arith.subf %17, %21 : vector<2x8x128xf32>
    %c0_i32_8 = arith.constant 0 : i32
    %23 = vector.broadcast %c0_i32_8 : i32 to vector<2x8x128xi32>
    %24 = arith.cmpi eq, %5, %23 : vector<2x8x128xi32>
    %cst_9 = arith.constant 0.000000e+00 : f32
    %25 = vector.broadcast %cst_9 : f32 to vector<2x8x128xf32>
    %26 = arith.select %24, %19, %25 : vector<2x8x128xi1>, vector<2x8x128xf32>
    %cst_10 = arith.constant dense<0.000000e+00> : vector<2x128xf32>
    %27 = vector.multi_reduction <add>, %26, %cst_10 [1] : vector<2x8x128xf32> to vector<2x128xf32>
    %cst_11 = arith.constant dense<0.000000e+00> : vector<2x128xf32>
    %28 = vector.multi_reduction <add>, %19, %cst_11 [1] : vector<2x8x128xf32> to vector<2x128xf32>
    %29 = arith.extui %24 : vector<2x8x128xi1> to vector<2x8x128xi32>
    %30 = arith.sitofp %29 : vector<2x8x128xi32> to vector<2x8x128xf32>
    %cst_12 = arith.constant dense<0.000000e+00> : vector<2x128xf32>
    %31 = vector.multi_reduction <add>, %30, %cst_12 [1] : vector<2x8x128xf32> to vector<2x128xf32>
    %cst_13 = arith.constant 0.000000e+00 : f32
    %32 = vector.broadcast %cst_13 : f32 to vector<2x8x128xf32>
    %33 = arith.select %24, %22, %32 : vector<2x8x128xi1>, vector<2x8x128xf32>
    %cst_14 = arith.constant dense<0.000000e+00> : vector<2x128xf32>
    %34 = vector.multi_reduction <add>, %33, %cst_14 [1] : vector<2x8x128xf32> to vector<2x128xf32>
    %35 = vector.extract_strided_slice %15 {offsets = [0, 1, 0, 0], sizes = [2, 1, 8, 128], strides = [1, 1, 1, 1]} : vector<2x4x8x128xf32> to vector<2x1x8x128xf32>
    %36 = vector.shape_cast %35 : vector<2x1x8x128xf32> to vector<2x8x128xf32>
    %37 = vector.extract_strided_slice %9 {offsets = [0, 1, 0, 0], sizes = [2, 1, 8, 128], strides = [1, 1, 1, 1]} : vector<2x4x8x128xf32> to vector<2x1x8x128xf32>
    %38 = vector.shape_cast %37 : vector<2x1x8x128xf32> to vector<2x8x128xf32>
    %39 = arith.subf %17, %38 : vector<2x8x128xf32>
    %c1_i32 = arith.constant 1 : i32
    %40 = vector.broadcast %c1_i32 : i32 to vector<2x8x128xi32>
    %41 = arith.cmpi eq, %5, %40 : vector<2x8x128xi32>
    %cst_15 = arith.constant 0.000000e+00 : f32
    %42 = vector.broadcast %cst_15 : f32 to vector<2x8x128xf32>
    %43 = arith.select %41, %36, %42 : vector<2x8x128xi1>, vector<2x8x128xf32>
    %cst_16 = arith.constant dense<0.000000e+00> : vector<2x128xf32>
    %44 = vector.multi_reduction <add>, %43, %cst_16 [1] : vector<2x8x128xf32> to vector<2x128xf32>
    %cst_17 = arith.constant dense<0.000000e+00> : vector<2x128xf32>
    %45 = vector.multi_reduction <add>, %36, %cst_17 [1] : vector<2x8x128xf32> to vector<2x128xf32>
    %46 = arith.extui %41 : vector<2x8x128xi1> to vector<2x8x128xi32>
    %47 = arith.sitofp %46 : vector<2x8x128xi32> to vector<2x8x128xf32>
    %cst_18 = arith.constant dense<0.000000e+00> : vector<2x128xf32>
    %48 = vector.multi_reduction <add>, %47, %cst_18 [1] : vector<2x8x128xf32> to vector<2x128xf32>
    %cst_19 = arith.constant 0.000000e+00 : f32
    %49 = vector.broadcast %cst_19 : f32 to vector<2x8x128xf32>
    %50 = arith.select %41, %39, %49 : vector<2x8x128xi1>, vector<2x8x128xf32>
    %cst_20 = arith.constant dense<0.000000e+00> : vector<2x128xf32>
    %51 = vector.multi_reduction <add>, %50, %cst_20 [1] : vector<2x8x128xf32> to vector<2x128xf32>
    %52 = vector.extract_strided_slice %15 {offsets = [0, 2, 0, 0], sizes = [2, 1, 8, 128], strides = [1, 1, 1, 1]} : vector<2x4x8x128xf32> to vector<2x1x8x128xf32>
    %53 = vector.shape_cast %52 : vector<2x1x8x128xf32> to vector<2x8x128xf32>
    %54 = vector.extract_strided_slice %9 {offsets = [0, 2, 0, 0], sizes = [2, 1, 8, 128], strides = [1, 1, 1, 1]} : vector<2x4x8x128xf32> to vector<2x1x8x128xf32>
    %55 = vector.shape_cast %54 : vector<2x1x8x128xf32> to vector<2x8x128xf32>
    %56 = arith.subf %17, %55 : vector<2x8x128xf32>
    %c2_i32 = arith.constant 2 : i32
    %57 = vector.broadcast %c2_i32 : i32 to vector<2x8x128xi32>
    %58 = arith.cmpi eq, %5, %57 : vector<2x8x128xi32>
    %cst_21 = arith.constant 0.000000e+00 : f32
    %59 = vector.broadcast %cst_21 : f32 to vector<2x8x128xf32>
    %60 = arith.select %58, %53, %59 : vector<2x8x128xi1>, vector<2x8x128xf32>
    %cst_22 = arith.constant dense<0.000000e+00> : vector<2x128xf32>
    %61 = vector.multi_reduction <add>, %60, %cst_22 [1] : vector<2x8x128xf32> to vector<2x128xf32>
    %cst_23 = arith.constant dense<0.000000e+00> : vector<2x128xf32>
    %62 = vector.multi_reduction <add>, %53, %cst_23 [1] : vector<2x8x128xf32> to vector<2x128xf32>
    %63 = arith.extui %58 : vector<2x8x128xi1> to vector<2x8x128xi32>
    %64 = arith.sitofp %63 : vector<2x8x128xi32> to vector<2x8x128xf32>
    %cst_24 = arith.constant dense<0.000000e+00> : vector<2x128xf32>
    %65 = vector.multi_reduction <add>, %64, %cst_24 [1] : vector<2x8x128xf32> to vector<2x128xf32>
    %cst_25 = arith.constant 0.000000e+00 : f32
    %66 = vector.broadcast %cst_25 : f32 to vector<2x8x128xf32>
    %67 = arith.select %58, %56, %66 : vector<2x8x128xi1>, vector<2x8x128xf32>
    %cst_26 = arith.constant dense<0.000000e+00> : vector<2x128xf32>
    %68 = vector.multi_reduction <add>, %67, %cst_26 [1] : vector<2x8x128xf32> to vector<2x128xf32>
    %69 = vector.extract_strided_slice %15 {offsets = [0, 3, 0, 0], sizes = [2, 1, 8, 128], strides = [1, 1, 1, 1]} : vector<2x4x8x128xf32> to vector<2x1x8x128xf32>
    %70 = vector.shape_cast %69 : vector<2x1x8x128xf32> to vector<2x8x128xf32>
    %71 = vector.extract_strided_slice %9 {offsets = [0, 3, 0, 0], sizes = [2, 1, 8, 128], strides = [1, 1, 1, 1]} : vector<2x4x8x128xf32> to vector<2x1x8x128xf32>
    %72 = vector.shape_cast %71 : vector<2x1x8x128xf32> to vector<2x8x128xf32>
    %73 = arith.subf %17, %72 : vector<2x8x128xf32>
    %c3_i32 = arith.constant 3 : i32
    %74 = vector.broadcast %c3_i32 : i32 to vector<2x8x128xi32>
    %75 = arith.cmpi eq, %5, %74 : vector<2x8x128xi32>
    %cst_27 = arith.constant 0.000000e+00 : f32
    %76 = vector.broadcast %cst_27 : f32 to vector<2x8x128xf32>
    %77 = arith.select %75, %70, %76 : vector<2x8x128xi1>, vector<2x8x128xf32>
    %cst_28 = arith.constant dense<0.000000e+00> : vector<2x128xf32>
    %78 = vector.multi_reduction <add>, %77, %cst_28 [1] : vector<2x8x128xf32> to vector<2x128xf32>
    %cst_29 = arith.constant dense<0.000000e+00> : vector<2x128xf32>
    %79 = vector.multi_reduction <add>, %70, %cst_29 [1] : vector<2x8x128xf32> to vector<2x128xf32>
    %80 = arith.extui %75 : vector<2x8x128xi1> to vector<2x8x128xi32>
    %81 = arith.sitofp %80 : vector<2x8x128xi32> to vector<2x8x128xf32>
    %cst_30 = arith.constant dense<0.000000e+00> : vector<2x128xf32>
    %82 = vector.multi_reduction <add>, %81, %cst_30 [1] : vector<2x8x128xf32> to vector<2x128xf32>
    %cst_31 = arith.constant 0.000000e+00 : f32
    %83 = vector.broadcast %cst_31 : f32 to vector<2x8x128xf32>
    %84 = arith.select %75, %73, %83 : vector<2x8x128xi1>, vector<2x8x128xf32>
    %cst_32 = arith.constant dense<0.000000e+00> : vector<2x128xf32>
    %85 = vector.multi_reduction <add>, %84, %cst_32 [1] : vector<2x8x128xf32> to vector<2x128xf32>
    %c0_33 = arith.constant 0 : index
    %c0_34 = arith.constant 0 : index
    %c0_35 = arith.constant 0 : index
    %c0_36 = arith.constant 0 : index
    %86 = vector.load %arg4[%c0_33, %c0_34, %c0_35, %c0_36] : memref<1x2x4x128xf32, #tpu.memory_space<vmem>>, vector<1x2x4x128xf32>
    %87 = vector.shape_cast %86 : vector<1x2x4x128xf32> to vector<2x4x128xf32>
    %88 = vector.shape_cast %27 : vector<2x128xf32> to vector<2x1x128xf32>
    %89 = vector.shape_cast %44 : vector<2x128xf32> to vector<2x1x128xf32>
    %90 = vector.shape_cast %61 : vector<2x128xf32> to vector<2x1x128xf32>
    %91 = vector.shape_cast %78 : vector<2x128xf32> to vector<2x1x128xf32>
    %92 = tpu.concatenate %88, %89, %90, %91 in 1 : vector<2x1x128xf32>, vector<2x1x128xf32>, vector<2x1x128xf32>, vector<2x1x128xf32> -> vector<2x4x128xf32>
    %93 = arith.addf %87, %92 : vector<2x4x128xf32>
    %c0_37 = arith.constant 0 : index
    %c0_38 = arith.constant 0 : index
    %c0_39 = arith.constant 0 : index
    %c0_40 = arith.constant 0 : index
    %94 = vector.load %arg4[%c0_37, %c0_38, %c0_39, %c0_40] : memref<1x2x4x128xf32, #tpu.memory_space<vmem>>, vector<1x2x4x128xf32>
    %95 = vector.shape_cast %94 : vector<1x2x4x128xf32> to vector<2x4x128xf32>
    %96 = vector.shape_cast %93 : vector<2x4x128xf32> to vector<1x2x4x128xf32>
    tpu.vector_store %arg4[%c0_37, %c0_38, %c0_39, %c0_40], %96 {strides = array<i32>} : memref<1x2x4x128xf32, #tpu.memory_space<vmem>>, vector<1x2x4x128xf32>,
    %c0_41 = arith.constant 0 : index
    %c0_42 = arith.constant 0 : index
    %c0_43 = arith.constant 0 : index
    %c0_44 = arith.constant 0 : index
    %97 = vector.load %arg5[%c0_41, %c0_42, %c0_43, %c0_44] : memref<1x2x4x128xf32, #tpu.memory_space<vmem>>, vector<1x2x4x128xf32>
    %98 = vector.shape_cast %97 : vector<1x2x4x128xf32> to vector<2x4x128xf32>
    %99 = vector.shape_cast %28 : vector<2x128xf32> to vector<2x1x128xf32>
    %100 = vector.shape_cast %45 : vector<2x128xf32> to vector<2x1x128xf32>
    %101 = vector.shape_cast %62 : vector<2x128xf32> to vector<2x1x128xf32>
    %102 = vector.shape_cast %79 : vector<2x128xf32> to vector<2x1x128xf32>
    %103 = tpu.concatenate %99, %100, %101, %102 in 1 : vector<2x1x128xf32>, vector<2x1x128xf32>, vector<2x1x128xf32>, vector<2x1x128xf32> -> vector<2x4x128xf32>
    %104 = arith.addf %98, %103 : vector<2x4x128xf32>
    %c0_45 = arith.constant 0 : index
    %c0_46 = arith.constant 0 : index
    %c0_47 = arith.constant 0 : index
    %c0_48 = arith.constant 0 : index
    %105 = vector.load %arg5[%c0_45, %c0_46, %c0_47, %c0_48] : memref<1x2x4x128xf32, #tpu.memory_space<vmem>>, vector<1x2x4x128xf32>
    %106 = vector.shape_cast %105 : vector<1x2x4x128xf32> to vector<2x4x128xf32>
    %107 = vector.shape_cast %104 : vector<2x4x128xf32> to vector<1x2x4x128xf32>
    tpu.vector_store %arg5[%c0_45, %c0_46, %c0_47, %c0_48], %107 {strides = array<i32>} : memref<1x2x4x128xf32, #tpu.memory_space<vmem>>, vector<1x2x4x128xf32>,
    %c0_49 = arith.constant 0 : index
    %c0_50 = arith.constant 0 : index
    %c0_51 = arith.constant 0 : index
    %c0_52 = arith.constant 0 : index
    %108 = vector.load %arg6[%c0_49, %c0_50, %c0_51, %c0_52] : memref<1x2x4x128xf32, #tpu.memory_space<vmem>>, vector<1x2x4x128xf32>
    %109 = vector.shape_cast %108 : vector<1x2x4x128xf32> to vector<2x4x128xf32>
    %110 = vector.shape_cast %31 : vector<2x128xf32> to vector<2x1x128xf32>
    %111 = vector.shape_cast %48 : vector<2x128xf32> to vector<2x1x128xf32>
    %112 = vector.shape_cast %65 : vector<2x128xf32> to vector<2x1x128xf32>
    %113 = vector.shape_cast %82 : vector<2x128xf32> to vector<2x1x128xf32>
    %114 = tpu.concatenate %110, %111, %112, %113 in 1 : vector<2x1x128xf32>, vector<2x1x128xf32>, vector<2x1x128xf32>, vector<2x1x128xf32> -> vector<2x4x128xf32>
    %115 = arith.addf %109, %114 : vector<2x4x128xf32>
    %c0_53 = arith.constant 0 : index
    %c0_54 = arith.constant 0 : index
    %c0_55 = arith.constant 0 : index
    %c0_56 = arith.constant 0 : index
    %116 = vector.load %arg6[%c0_53, %c0_54, %c0_55, %c0_56] : memref<1x2x4x128xf32, #tpu.memory_space<vmem>>, vector<1x2x4x128xf32>
    %117 = vector.shape_cast %116 : vector<1x2x4x128xf32> to vector<2x4x128xf32>
    %118 = vector.shape_cast %115 : vector<2x4x128xf32> to vector<1x2x4x128xf32>
    tpu.vector_store %arg6[%c0_53, %c0_54, %c0_55, %c0_56], %118 {strides = array<i32>} : memref<1x2x4x128xf32, #tpu.memory_space<vmem>>, vector<1x2x4x128xf32>,
    %c0_57 = arith.constant 0 : index
    %c0_58 = arith.constant 0 : index
    %c0_59 = arith.constant 0 : index
    %c0_60 = arith.constant 0 : index
    %119 = vector.load %arg7[%c0_57, %c0_58, %c0_59, %c0_60] : memref<1x2x4x128xf32, #tpu.memory_space<vmem>>, vector<1x2x4x128xf32>
    %120 = vector.shape_cast %119 : vector<1x2x4x128xf32> to vector<2x4x128xf32>
    %121 = vector.shape_cast %34 : vector<2x128xf32> to vector<2x1x128xf32>
    %122 = vector.shape_cast %51 : vector<2x128xf32> to vector<2x1x128xf32>
    %123 = vector.shape_cast %68 : vector<2x128xf32> to vector<2x1x128xf32>
    %124 = vector.shape_cast %85 : vector<2x128xf32> to vector<2x1x128xf32>
    %125 = tpu.concatenate %121, %122, %123, %124 in 1 : vector<2x1x128xf32>, vector<2x1x128xf32>, vector<2x1x128xf32>, vector<2x1x128xf32> -> vector<2x4x128xf32>
    %126 = arith.addf %120, %125 : vector<2x4x128xf32>
    %c0_61 = arith.constant 0 : index
    %c0_62 = arith.constant 0 : index
    %c0_63 = arith.constant 0 : index
    %c0_64 = arith.constant 0 : index
    %127 = vector.load %arg7[%c0_61, %c0_62, %c0_63, %c0_64] : memref<1x2x4x128xf32, #tpu.memory_space<vmem>>, vector<1x2x4x128xf32>
    %128 = vector.shape_cast %127 : vector<1x2x4x128xf32> to vector<2x4x128xf32>
    %129 = vector.shape_cast %126 : vector<2x4x128xf32> to vector<1x2x4x128xf32>
    tpu.vector_store %arg7[%c0_61, %c0_62, %c0_63, %c0_64], %129 {strides = array<i32>} : memref<1x2x4x128xf32, #tpu.memory_space<vmem>>, vector<1x2x4x128xf32>,
    return
  }
  func.func @transform_0(%arg0: i32, %arg1: i32) -> (i32, i32, i32, i32) {
    %c1_i32 = arith.constant 1 : i32
    %0 = arith.muli %arg0, %c1_i32 : i32
    %1 = arith.addi %0, %arg1 : i32
    %c0_i32 = arith.constant 0 : i32
    %2 = arith.minsi %1, %c0_i32 : i32
    %c0_i32_0 = arith.constant 0 : i32
    %c0_i32_1 = arith.constant 0 : i32
    %c0_i32_2 = arith.constant 0 : i32
    %c0_i32_3 = arith.constant 0 : i32
    return %c0_i32_0, %c0_i32_1, %2, %c0_i32_2 : i32, i32, i32, i32
  }
  func.func @transform_1(%arg0: i32, %arg1: i32) -> (i32, i32, i32) {
    %c1_i32 = arith.constant 1 : i32
    %0 = arith.muli %arg0, %c1_i32 : i32
    %1 = arith.addi %0, %arg1 : i32
    %c0_i32 = arith.constant 0 : i32
    %2 = arith.minsi %1, %c0_i32 : i32
    %c0_i32_0 = arith.constant 0 : i32
    %c0_i32_1 = arith.constant 0 : i32
    %c0_i32_2 = arith.constant 0 : i32
    return %c0_i32_0, %2, %c0_i32_1 : i32, i32, i32
  }
  func.func @transform_2(%arg0: i32, %arg1: i32) -> (i32, i32, i32, i32) {
    %c0_i32 = arith.constant 0 : i32
    %c0_i32_0 = arith.constant 0 : i32
    %c0_i32_1 = arith.constant 0 : i32
    %c0_i32_2 = arith.constant 0 : i32
    return %arg0, %c0_i32, %c0_i32_0, %c0_i32_1 : i32, i32, i32, i32
  }
  func.func @transform_3(%arg0: i32, %arg1: i32) -> (i32, i32, i32, i32) {
    %c0_i32 = arith.constant 0 : i32
    %c0_i32_0 = arith.constant 0 : i32
    %c0_i32_1 = arith.constant 0 : i32
    %c0_i32_2 = arith.constant 0 : i32
    return %arg0, %c0_i32, %c0_i32_0, %c0_i32_1 : i32, i32, i32, i32
  }
  func.func @transform_4(%arg0: i32, %arg1: i32) -> (i32, i32, i32, i32) {
    %c0_i32 = arith.constant 0 : i32
    %c0_i32_0 = arith.constant 0 : i32
    %c0_i32_1 = arith.constant 0 : i32
    %c0_i32_2 = arith.constant 0 : i32
    return %arg0, %c0_i32, %c0_i32_0, %c0_i32_1 : i32, i32, i32, i32
  }
  func.func @transform_5(%arg0: i32, %arg1: i32) -> (i32, i32, i32, i32) {
    %c0_i32 = arith.constant 0 : i32
    %c0_i32_0 = arith.constant 0 : i32
    %c0_i32_1 = arith.constant 0 : i32
    %c0_i32_2 = arith.constant 0 : i32
    return %arg0, %c0_i32, %c0_i32_0, %c0_i32_1 : i32, i32, i32, i32
  }
}

</mosaic_0001>

<llo_original>
// kernel: dc_and_ce_loss.1
$region0: #{dc_and_ce_loss.1}
  #allocation0 [shape = 'u32[]', space=smem, size = 0x4, offset = 0x4, fixed_abs, tag = 'smem constant byte address 0x4 - core index']
  #allocation1 [shape = 'u32[144,128]{1,0:T(1,128)}', space=vmem, size = 0x12000, scoped, tag = 'internal scratch']
  %s0 = inlined_call_operand.vmem [shape: f32[2,4,8,128], index: 0, kind: input, shape index: {}]
  %s1 = inlined_call_operand.vmem [shape: s8[2,8,128], index: 1, kind: input, shape index: {}]
  %s2 = inlined_call_operand.vmem [shape: f32[1,2,4,128], index: 2, kind: output, shape index: {0}]
  %s3 = inlined_call_operand.vmem [shape: f32[1,2,4,128], index: 3, kind: output, shape index: {1}]
  %s4 = inlined_call_operand.vmem [shape: f32[1,2,4,128], index: 4, kind: output, shape index: {2}]
  %s5 = inlined_call_operand.vmem [shape: f32[1,2,4,128], index: 5, kind: output, shape index: {3}]
  %6 = xla_tuple %s2, %s3, %s4, %s5
  %s7 = sld [smem:[#allocation0]]
  $region46: #{dc_and_ce_loss.1} parent=0
    _
  %s9 = ssub.s32 1, %s7
  %s10 = scalar_select 0, %s9, %s7
  // Predicated region
  $region2: #{dc_and_ce_loss.1} parent=0 // pred_check
    _
  $region3: #{dc_and_ce_loss.1} parent=0 // pred_check_branch
    %12 = sbr.rel (0) target = $region5
  $region4: #{dc_and_ce_loss.1} parent=0 // pred_region
    %s13 = sadd.s32 0, 0
    %p14 = scmp.lt.s32.totalorder %s13, 0
    %s15 = scalar_select %p14, %s13, 0
    %p16 = scmp.lt.s32.totalorder %s15, 0
    %s17 = scalar_select %p16, %s15, 0
    %s18 = smul.addr %s17, 8
    %s19 = scalar_lea.vmem %s0, %s18
    %s20 = sadd.s32 0, 0
    %p21 = scmp.lt.s32.totalorder %s20, 0
    %s22 = scalar_select %p21, %s20, 0
  $region5: #{dc_and_ce_loss.1} parent=0 // pred_fallthru
    _
  // Predicated region
  $region6: #{dc_and_ce_loss.1} parent=0 // pred_check
    _
  $region7: #{dc_and_ce_loss.1} parent=0 // pred_check_branch
    %24 = sbr.rel (0) target = $region9
  $region8: #{dc_and_ce_loss.1} parent=0 // pred_region
    %s25 = sadd.s32 0, 0
    %p26 = scmp.lt.s32.totalorder %s25, 0
    %s27 = scalar_select %p26, %s25, 0
    %p28 = scmp.lt.s32.totalorder %s27, 0
    %s29 = scalar_select %p28, %s27, 0
    %s30 = smul.addr %s29, 2
    %s31 = scalar_lea.vmem %s1, %s30
    %s32 = sadd.s32 0, 0
    %p33 = scmp.lt.s32.totalorder %s32, 0
    %s34 = scalar_select %p33, %s32, 0
  $region9: #{dc_and_ce_loss.1} parent=0 // pred_fallthru
    _
  %s35 = sadd.s32 0, 0
  %p36 = scmp.lt.s32.totalorder %s35, 0
  %s37 = scalar_select %p36, %s35, 0
  %p38 = scmp.lt.s32.totalorder %s37, 0
  %s39 = scalar_select %p38, %s37, 0
  %s40 = smul.addr %s39, 8
  %s41 = scalar_lea.vmem %s0, %s40
  %s42 = sadd.s32 0, 0
  %p43 = scmp.lt.s32.totalorder %s42, 0
  %s44 = scalar_select %p43, %s42, 0
  %p45 = scmp.lt.s32.totalorder %s44, 0
  %s46 = scalar_select %p45, %s44, 0
  %s47 = smul.addr %s46, 2
  %s48 = scalar_lea.vmem %s1, %s47
  %s49 = sadd.s32 0, 0
  %p50 = scmp.lt.s32.totalorder %s49, 0
  %s51 = scalar_select %p50, %s49, 0
  %p52 = scmp.lt.s32.totalorder %s51, 0
  %s53 = scalar_select %p52, %s51, 0
  %s54 = smul.addr %s53, 8
  %s55 = scalar_lea.vmem %s0, %s54
  %s56 = sadd.s32 0, 0
  %p57 = scmp.lt.s32.totalorder %s56, 0
  %s58 = scalar_select %p57, %s56, 0
  %s59 = sadd.s32 0, 0
  %p60 = scmp.lt.s32.totalorder %s59, 0
  %s61 = scalar_select %p60, %s59, 0
  %p62 = scmp.lt.s32.totalorder %s61, 0
  %s63 = scalar_select %p62, %s61, 0
  %s64 = smul.addr %s63, 2
  %s65 = scalar_lea.vmem %s1, %s64
  %s66 = sadd.s32 0, 0
  %p67 = scmp.lt.s32.totalorder %s66, 0
  %s68 = scalar_select %p67, %s66, 0
  %p69 = scmp.eq.s32.totalorder 0, 0
  // Predicated region
  $region10: #{dc_and_ce_loss.1} parent=0 // pred_check
    %p70 = pneg %p69
  $region11: #{dc_and_ce_loss.1} parent=0 // pred_check_branch
    %72 = sbr.rel (%p70) target = $region13
  $region12: #{dc_and_ce_loss.1} parent=0 // pred_region
    %73 = vst [vmem:[%s2] sm:$0xf] 0.0
    %74 = vst [vmem:[%s2 + $0x4] sm:$0xf] 0.0
    %75 = vst [vmem:[%s3] sm:$0xf] 0.0
    %76 = vst [vmem:[%s3 + $0x4] sm:$0xf] 0.0
    %77 = vst [vmem:[%s4] sm:$0xf] 0.0
    %78 = vst [vmem:[%s4 + $0x4] sm:$0xf] 0.0
    %79 = vst [vmem:[%s5] sm:$0xf] 0.0
    %80 = vst [vmem:[%s5 + $0x4] sm:$0xf] 0.0
  $region13: #{dc_and_ce_loss.1} parent=0 // pred_fallthru
    _
  %v81 = vld [vmem:[%s55] sm:$0xff]
  %v82 = vld [vmem:[%s55 + $0x8] sm:$0xff]
  %v83 = vld [vmem:[%s55 + $0x10] sm:$0xff]
  %v84 = vld [vmem:[%s55 + $0x18] sm:$0xff]
  %v85 = vld [vmem:[%s55 + $0x20] sm:$0xff]
  %v86 = vld [vmem:[%s55 + $0x28] sm:$0xff]
  %v87 = vld [vmem:[%s55 + $0x30] sm:$0xff]
  %v88 = vld [vmem:[%s55 + $0x38] sm:$0xff]
  %v89 = vld [vmem:[%s65] sm:$0x3]
  %v90 = vld [vmem:[%s65 + $0x2] sm:$0x3]
  %v91 = vunpack.c.0.s8 %v89
  %v92 = vunpack.c.0.s8 %v90
  %v93 = vmax.f32 %v81, %v83
  %v94 = vmax.f32 %v82, %v84
  %v95 = vmax.f32 %v93, %v94
  %v96 = vmax.f32 %v85, %v87
  %v97 = vmax.f32 %v86, %v88
  %v98 = vmax.f32 %v96, %v97
  %v99 = vsub.f32 %v81, %v95
  %v100 = vsub.f32 %v82, %v95
  %v101 = vsub.f32 %v83, %v95
  %v102 = vsub.f32 %v84, %v95
  %v103 = vsub.f32 %v85, %v98
  %v104 = vsub.f32 %v86, %v98
  %v105 = vsub.f32 %v87, %v98
  %v106 = vsub.f32 %v88, %v98
  %v107 = vmul.f32 %v99, 1.442695
  %v108 = vpow.pop %v107
  %v109 = vmul.f32 %v100, 1.442695
  %v110 = vpow.pop %v109
  %v111 = vmul.f32 %v101, 1.442695
  %v112 = vpow.pop %v111
  %v113 = vmul.f32 %v102, 1.442695
  %v114 = vpow.pop %v113
  %v115 = vmul.f32 %v103, 1.442695
  %v116 = vpow.pop %v115
  %v117 = vmul.f32 %v104, 1.442695
  %v118 = vpow.pop %v117
  %v119 = vmul.f32 %v105, 1.442695
  %v120 = vpow.pop %v119
  %v121 = vmul.f32 %v106, 1.442695
  %v122 = vpow.pop %v121
  %v123 = vadd.f32 %v108, %v110
  %v124 = vadd.f32 %v123, %v112
  %v125 = vadd.f32 %v124, %v114
  %v126 = vadd.f32 %v116, %v118
  %v127 = vadd.f32 %v126, %v120
  %v128 = vadd.f32 %v127, %v122
  %v129 = vrcp.pop %v125
  %v130 = vrcp.pop %v128
  %v131 = vmul.f32 %v108, %v129
  %v132 = vmul.f32 %v110, %v129
  %v133 = vmul.f32 %v112, %v129
  %v134 = vmul.f32 %v114, %v129
  %v135 = vmul.f32 %v116, %v130
  %v136 = vmul.f32 %v118, %v130
  %v137 = vmul.f32 %v120, %v130
  %v138 = vmul.f32 %v122, %v130
  %v139 = vlog2.pop %v125
  %v140 = vmul.f32 %v139, 0.6931472
  %v141 = vlog2.pop %v128
  %v142 = vmul.f32 %v141, 0.6931472
  %v143 = vsub.f32 %v140, %v99
  %v144 = vsub.f32 %v142, %v103
  %vm145 = vcmp.eq.s32.totalorder %v91, 0
  %vm146 = vcmp.eq.s32.totalorder %v92, 0
  %v147 = vsel %vm145, %v131, 0.0
  %v148 = vsel %vm146, %v135, 0.0
  %v149 = vrot.slane %v147, 4
  %v150 = vadd.f32 %v147, %v149
  %v151 = vrot.slane %v150, 2
  %v152 = vadd.f32 %v150, %v151
  %v153 = vrot.slane %v152, 1
  %v154 = vadd.f32 %v152, %v153
  %v155 = vrot.slane %v148, 4
  %v156 = vadd.f32 %v148, %v155
  %v157 = vrot.slane %v156, 2
  %v158 = vadd.f32 %v156, %v157
  %v159 = vrot.slane %v158, 1
  %v160 = vadd.f32 %v158, %v159
  %v161 = vrot.slane %v131, 4
  %v162 = vadd.f32 %v131, %v161
  %v163 = vrot.slane %v162, 2
  %v164 = vadd.f32 %v162, %v163
  %v165 = vrot.slane %v164, 1
  %v166 = vadd.f32 %v164, %v165
  %v167 = vrot.slane %v135, 4
  %v168 = vadd.f32 %v135, %v167
  %v169 = vrot.slane %v168, 2
  %v170 = vadd.f32 %v168, %v169
  %v171 = vrot.slane %v170, 1
  %v172 = vadd.f32 %v170, %v171
  %v173 = vsel %vm145, 1, 0
  %v174 = vsel %vm146, 1, 0
  %v175 = vcvt.s32.f32 %v173
  %v176 = vcvt.s32.f32 %v174
  %v177 = vrot.slane %v175, 4
  %v178 = vadd.f32 %v175, %v177
  %v179 = vrot.slane %v178, 2
  %v180 = vadd.f32 %v178, %v179
  %v181 = vrot.slane %v180, 1
  %v182 = vadd.f32 %v180, %v181
  %v183 = vrot.slane %v176, 4
  %v184 = vadd.f32 %v176, %v183
  %v185 = vrot.slane %v184, 2
  %v186 = vadd.f32 %v184, %v185
  %v187 = vrot.slane %v186, 1
  %v188 = vadd.f32 %v186, %v187
  %v189 = vsel %vm145, %v143, 0.0
  %v190 = vsel %vm146, %v144, 0.0
  %v191 = vrot.slane %v189, 4
  %v192 = vadd.f32 %v189, %v191
  %v193 = vrot.slane %v192, 2
  %v194 = vadd.f32 %v192, %v193
  %v195 = vrot.slane %v194, 1
  %v196 = vadd.f32 %v194, %v195
  %v197 = vrot.slane %v190, 4
  %v198 = vadd.f32 %v190, %v197
  %v199 = vrot.slane %v198, 2
  %v200 = vadd.f32 %v198, %v199
  %v201 = vrot.slane %v200, 1
  %v202 = vadd.f32 %v200, %v201
  %v203 = vsub.f32 %v140, %v100
  %v204 = vsub.f32 %v142, %v104
  %vm205 = vcmp.eq.s32.totalorder %v91, 1
  %vm206 = vcmp.eq.s32.totalorder %v92, 1
  %v207 = vsel %vm205, %v132, 0.0
  %v208 = vsel %vm206, %v136, 0.0
  %v209 = vrot.slane %v207, 4
  %v210 = vadd.f32 %v207, %v209
  %v211 = vrot.slane %v210, 2
  %v212 = vadd.f32 %v210, %v211
  %v213 = vrot.slane %v212, 1
  %v214 = vadd.f32 %v212, %v213
  %v215 = vrot.slane %v208, 4
  %v216 = vadd.f32 %v208, %v215
  %v217 = vrot.slane %v216, 2
  %v218 = vadd.f32 %v216, %v217
  %v219 = vrot.slane %v218, 1
  %v220 = vadd.f32 %v218, %v219
  %v221 = vrot.slane %v132, 4
  %v222 = vadd.f32 %v132, %v221
  %v223 = vrot.slane %v222, 2
  %v224 = vadd.f32 %v222, %v223
  %v225 = vrot.slane %v224, 1
  %v226 = vadd.f32 %v224, %v225
  %v227 = vrot.slane %v136, 4
  %v228 = vadd.f32 %v136, %v227
  %v229 = vrot.slane %v228, 2
  %v230 = vadd.f32 %v228, %v229
  %v231 = vrot.slane %v230, 1
  %v232 = vadd.f32 %v230, %v231
  %v233 = vsel %vm205, 1, 0
  %v234 = vsel %vm206, 1, 0
  %v235 = vcvt.s32.f32 %v233
  %v236 = vcvt.s32.f32 %v234
  %v237 = vrot.slane %v235, 4
  %v238 = vadd.f32 %v235, %v237
  %v239 = vrot.slane %v238, 2
  %v240 = vadd.f32 %v238, %v239
  %v241 = vrot.slane %v240, 1
  %v242 = vadd.f32 %v240, %v241
  %v243 = vrot.slane %v236, 4
  %v244 = vadd.f32 %v236, %v243
  %v245 = vrot.slane %v244, 2
  %v246 = vadd.f32 %v244, %v245
  %v247 = vrot.slane %v246, 1
  %v248 = vadd.f32 %v246, %v247
  %v249 = vsel %vm205, %v203, 0.0
  %v250 = vsel %vm206, %v204, 0.0
  %v251 = vrot.slane %v249, 4
  %v252 = vadd.f32 %v249, %v251
  %v253 = vrot.slane %v252, 2
  %v254 = vadd.f32 %v252, %v253
  %v255 = vrot.slane %v254, 1
  %v256 = vadd.f32 %v254, %v255
  %v257 = vrot.slane %v250, 4
  %v258 = vadd.f32 %v250, %v257
  %v259 = vrot.slane %v258, 2
  %v260 = vadd.f32 %v258, %v259
  %v261 = vrot.slane %v260, 1
  %v262 = vadd.f32 %v260, %v261
  %v263 = vsub.f32 %v140, %v101
  %v264 = vsub.f32 %v142, %v105
  %vm265 = vcmp.eq.s32.totalorder %v91, 2
  %vm266 = vcmp.eq.s32.totalorder %v92, 2
  %v267 = vsel %vm265, %v133, 0.0
  %v268 = vsel %vm266, %v137, 0.0
  %v269 = vrot.slane %v267, 4
  %v270 = vadd.f32 %v267, %v269
  %v271 = vrot.slane %v270, 2
  %v272 = vadd.f32 %v270, %v271
  %v273 = vrot.slane %v272, 1
  %v274 = vadd.f32 %v272, %v273
  %v275 = vrot.slane %v268, 4
  %v276 = vadd.f32 %v268, %v275
  %v277 = vrot.slane %v276, 2
  %v278 = vadd.f32 %v276, %v277
  %v279 = vrot.slane %v278, 1
  %v280 = vadd.f32 %v278, %v279
  %v281 = vrot.slane %v133, 4
  %v282 = vadd.f32 %v133, %v281
  %v283 = vrot.slane %v282, 2
  %v284 = vadd.f32 %v282, %v283
  %v285 = vrot.slane %v284, 1
  %v286 = vadd.f32 %v284, %v285
  %v287 = vrot.slane %v137, 4
  %v288 = vadd.f32 %v137, %v287
  %v289 = vrot.slane %v288, 2
  %v290 = vadd.f32 %v288, %v289
  %v291 = vrot.slane %v290, 1
  %v292 = vadd.f32 %v290, %v291
  %v293 = vsel %vm265, 1, 0
  %v294 = vsel %vm266, 1, 0
  %v295 = vcvt.s32.f32 %v293
  %v296 = vcvt.s32.f32 %v294
  %v297 = vrot.slane %v295, 4
  %v298 = vadd.f32 %v295, %v297
  %v299 = vrot.slane %v298, 2
  %v300 = vadd.f32 %v298, %v299
  %v301 = vrot.slane %v300, 1
  %v302 = vadd.f32 %v300, %v301
  %v303 = vrot.slane %v296, 4
  %v304 = vadd.f32 %v296, %v303
  %v305 = vrot.slane %v304, 2
  %v306 = vadd.f32 %v304, %v305
  %v307 = vrot.slane %v306, 1
  %v308 = vadd.f32 %v306, %v307
  %v309 = vsel %vm265, %v263, 0.0
  %v310 = vsel %vm266, %v264, 0.0
  %v311 = vrot.slane %v309, 4
  %v312 = vadd.f32 %v309, %v311
  %v313 = vrot.slane %v312, 2
  %v314 = vadd.f32 %v312, %v313
  %v315 = vrot.slane %v314, 1
  %v316 = vadd.f32 %v314, %v315
  %v317 = vrot.slane %v310, 4
  %v318 = vadd.f32 %v310, %v317
  %v319 = vrot.slane %v318, 2
  %v320 = vadd.f32 %v318, %v319
  %v321 = vrot.slane %v320, 1
  %v322 = vadd.f32 %v320, %v321
  %v323 = vsub.f32 %v140, %v102
  %v324 = vsub.f32 %v142, %v106
  %vm325 = vcmp.eq.s32.totalorder %v91, 3
  %vm326 = vcmp.eq.s32.totalorder %v92, 3
  %v327 = vsel %vm325, %v134, 0.0
  %v328 = vsel %vm326, %v138, 0.0
  %v329 = vrot.slane %v327, 4
  %v330 = vadd.f32 %v327, %v329
  %v331 = vrot.slane %v330, 2
  %v332 = vadd.f32 %v330, %v331
  %v333 = vrot.slane %v332, 1
  %v334 = vadd.f32 %v332, %v333
  %v335 = vrot.slane %v328, 4
  %v336 = vadd.f32 %v328, %v335
  %v337 = vrot.slane %v336, 2
  %v338 = vadd.f32 %v336, %v337
  %v339 = vrot.slane %v338, 1
  %v340 = vadd.f32 %v338, %v339
  %v341 = vrot.slane %v134, 4
  %v342 = vadd.f32 %v134, %v341
  %v343 = vrot.slane %v342, 2
  %v344 = vadd.f32 %v342, %v343
  %v345 = vrot.slane %v344, 1
  %v346 = vadd.f32 %v344, %v345
  %v347 = vrot.slane %v138, 4
  %v348 = vadd.f32 %v138, %v347
  %v349 = vrot.slane %v348, 2
  %v350 = vadd.f32 %v348, %v349
  %v351 = vrot.slane %v350, 1
  %v352 = vadd.f32 %v350, %v351
  %v353 = vsel %vm325, 1, 0
  %v354 = vsel %vm326, 1, 0
  %v355 = vcvt.s32.f32 %v353
  %v356 = vcvt.s32.f32 %v354
  %v357 = vrot.slane %v355, 4
  %v358 = vadd.f32 %v355, %v357
  %v359 = vrot.slane %v358, 2
  %v360 = vadd.f32 %v358, %v359
  %v361 = vrot.slane %v360, 1
  %v362 = vadd.f32 %v360, %v361
  %v363 = vrot.slane %v356, 4
  %v364 = vadd.f32 %v356, %v363
  %v365 = vrot.slane %v364, 2
  %v366 = vadd.f32 %v364, %v365
  %v367 = vrot.slane %v366, 1
  %v368 = vadd.f32 %v366, %v367
  %v369 = vsel %vm325, %v323, 0.0
  %v370 = vsel %vm326, %v324, 0.0
  %v371 = vrot.slane %v369, 4
  %v372 = vadd.f32 %v369, %v371
  %v373 = vrot.slane %v372, 2
  %v374 = vadd.f32 %v372, %v373
  %v375 = vrot.slane %v374, 1
  %v376 = vadd.f32 %v374, %v375
  %v377 = vrot.slane %v370, 4
  %v378 = vadd.f32 %v370, %v377
  %v379 = vrot.slane %v378, 2
  %v380 = vadd.f32 %v378, %v379
  %v381 = vrot.slane %v380, 1
  %v382 = vadd.f32 %v380, %v381
  %v383 = vld [vmem:[%s2] sm:$0xf]
  %v384 = vld [vmem:[%s2 + $0x4] sm:$0xf]
  %vm385 = vcmask 1040384
  %v386 = vsel %vm385, %v154, %v214
  %v387 = vsel %vm385, %v160, %v220
  %vm388 = vcmask 1041408
  %v389 = vsel %vm388, %v386, %v274
  %v390 = vsel %vm388, %v387, %v280
  %vm391 = vcmask 1042432
  %v392 = vsel %vm391, %v389, %v334
  %v393 = vsel %vm391, %v390, %v340
  %v394 = vadd.f32 %v383, %v392
  %v395 = vadd.f32 %v384, %v393
  %396 = vst [vmem:[%s2] sm:$0xf] %v394
  %397 = vst [vmem:[%s2 + $0x4] sm:$0xf] %v395
  %v398 = vld [vmem:[%s3] sm:$0xf]
  %v399 = vld [vmem:[%s3 + $0x4] sm:$0xf]
  %v400 = vsel %vm385, %v166, %v226
  %v401 = vsel %vm385, %v172, %v232
  %v402 = vsel %vm388, %v400, %v286
  %v403 = vsel %vm388, %v401, %v292
  %v404 = vsel %vm391, %v402, %v346
  %v405 = vsel %vm391, %v403, %v352
  %v406 = vadd.f32 %v398, %v404
  %v407 = vadd.f32 %v399, %v405
  %408 = vst [vmem:[%s3] sm:$0xf] %v406
  %409 = vst [vmem:[%s3 + $0x4] sm:$0xf] %v407
  %v410 = vld [vmem:[%s4] sm:$0xf]
  %v411 = vld [vmem:[%s4 + $0x4] sm:$0xf]
  %v412 = vsel %vm385, %v182, %v242
  %v413 = vsel %vm385, %v188, %v248
  %v414 = vsel %vm388, %v412, %v302
  %v415 = vsel %vm388, %v413, %v308
  %v416 = vsel %vm391, %v414, %v362
  %v417 = vsel %vm391, %v415, %v368
  %v418 = vadd.f32 %v410, %v416
  %v419 = vadd.f32 %v411, %v417
  %420 = vst [vmem:[%s4] sm:$0xf] %v418
  %421 = vst [vmem:[%s4 + $0x4] sm:$0xf] %v419
  %v422 = vld [vmem:[%s5] sm:$0xf]
  %v423 = vld [vmem:[%s5 + $0x4] sm:$0xf]
  %v424 = vsel %vm385, %v196, %v256
  %v425 = vsel %vm385, %v202, %v262
  %v426 = vsel %vm388, %v424, %v316
  %v427 = vsel %vm388, %v425, %v322
  %v428 = vsel %vm391, %v426, %v376
  %v429 = vsel %vm391, %v427, %v382
  %v430 = vadd.f32 %v422, %v428
  %v431 = vadd.f32 %v423, %v429
  %432 = vst [vmem:[%s5] sm:$0xf] %v430
  %433 = vst [vmem:[%s5 + $0x4] sm:$0xf] %v431
  // Predicated region
  $region14: #{dc_and_ce_loss.1} parent=0 // pred_check
    _
  $region15: #{dc_and_ce_loss.1} parent=0 // pred_check_branch
    %435 = sbr.rel (0) target = $region17
  $region16: #{dc_and_ce_loss.1} parent=0 // pred_region
    _
  $region17: #{dc_and_ce_loss.1} parent=0 // pred_fallthru
    _
  // Predicated region
  $region18: #{dc_and_ce_loss.1} parent=0 // pred_check
    _
  $region19: #{dc_and_ce_loss.1} parent=0 // pred_check_branch
    %437 = sbr.rel (0) target = $region21
  $region20: #{dc_and_ce_loss.1} parent=0 // pred_region
    _
  $region21: #{dc_and_ce_loss.1} parent=0 // pred_fallthru
    _
  // Predicated region
  $region22: #{dc_and_ce_loss.1} parent=0 // pred_check
    _
  $region23: #{dc_and_ce_loss.1} parent=0 // pred_check_branch
    %439 = sbr.rel (0) target = $region25
  $region24: #{dc_and_ce_loss.1} parent=0 // pred_region
    _
  $region25: #{dc_and_ce_loss.1} parent=0 // pred_fallthru
    _
  // Predicated region
  $region26: #{dc_and_ce_loss.1} parent=0 // pred_check
    _
  $region27: #{dc_and_ce_loss.1} parent=0 // pred_check_branch
    %441 = sbr.rel (0) target = $region29
  $region28: #{dc_and_ce_loss.1} parent=0 // pred_region
    _
  $region29: #{dc_and_ce_loss.1} parent=0 // pred_fallthru
    _
  // Predicated region
  $region30: #{dc_and_ce_loss.1} parent=0 // pred_check
    _
  $region31: #{dc_and_ce_loss.1} parent=0 // pred_check_branch
    %443 = sbr.rel (0) target = $region33
  $region32: #{dc_and_ce_loss.1} parent=0 // pred_region
    _
  $region33: #{dc_and_ce_loss.1} parent=0 // pred_fallthru
    _
  // Predicated region
  $region34: #{dc_and_ce_loss.1} parent=0 // pred_check
    _
  $region35: #{dc_and_ce_loss.1} parent=0 // pred_check_branch
    %445 = sbr.rel (0) target = $region37
  $region36: #{dc_and_ce_loss.1} parent=0 // pred_region
    _
  $region37: #{dc_and_ce_loss.1} parent=0 // pred_fallthru
    _
  // Predicated region
  $region38: #{dc_and_ce_loss.1} parent=0 // pred_check
    _
  $region39: #{dc_and_ce_loss.1} parent=0 // pred_check_branch
    %447 = sbr.rel (0) target = $region41
  $region40: #{dc_and_ce_loss.1} parent=0 // pred_region
    _
  $region41: #{dc_and_ce_loss.1} parent=0 // pred_fallthru
    _
  // Predicated region
  $region42: #{dc_and_ce_loss.1} parent=0 // pred_check
    _
  $region43: #{dc_and_ce_loss.1} parent=0 // pred_check_branch
    %449 = sbr.rel (0) target = $region45
  $region44: #{dc_and_ce_loss.1} parent=0 // pred_region
    _
  $region45: #{dc_and_ce_loss.1} parent=0 // pred_fallthru
    _

</llo_original>
